<compile_context>
chip_gen: v7x
topology: tpu7x:2x2x1
jax: 0.10.0
libtpu: 0.0.40
codegen_flags: <defaults>
</compile_context>

<pallas_src>
import jax
import jax.numpy as jnp
from jax.experimental import pallas as pl
from jax.experimental.pallas import tpu as pltpu


def _round_up(x, m):
    return (x + m - 1) // m * m


def _rel_pos_kernel(q_ref, rhs_ref, out_ref):
    # q_ref  : (tb, d)      q rows (one batch tile) for one in-block position
    # rhs_ref: (d, n_pad)   fused width+height table for that position
    # out_ref: (tb, n_pad)  lane-dense logits tile
    out_ref[...] = jnp.dot(
        q_ref[...], rhs_ref[...],
        preferred_element_type=jnp.float32).astype(out_ref.dtype)


def _build_fused_rhs(rel_height, rel_width, block_size, n_pad, compute_dtype):
    """rhs[x*B+y, dd, a*R+c] = rel_width[R-1+c-y, dd] + rel_height[R-1+a-x, dd].

    In a real model this depends only on the parameters, so it can be built
    once per parameter update and cached / jitted separately from the kernel.
    """
    R = (rel_height.shape[0] + 1) // 2
    B = block_size
    # idx[p, k] = R-1 + k - p  (>= 0 because R >= B, asserted by the caller)
    idx = (R - 1) + jnp.arange(R)[None, :] - jnp.arange(B)[:, None]      # (B, R)
    wg = jnp.transpose(rel_width[idx], (0, 2, 1))    # (B, d, R)  [y, dd, c]
    hg = jnp.transpose(rel_height[idx], (0, 2, 1))   # (B, d, R)  [x, dd, a]
    # table[x, y, dd, a, c] = hg[x, dd, a] + wg[y, dd, c]
    table = hg[:, None, :, :, None] + wg[None, :, :, None, :]            # (B,B,d,R,R)
    table = table.reshape(B * B, rel_height.shape[1], R * R)
    if n_pad > R * R:
        table = jnp.pad(table, ((0, 0), (0, 0), (0, n_pad - R * R)))
    return table.astype(compute_dtype)


def rel_pos_emb(q, rel_height, rel_width, block_size, *,
                compute_dtype=jnp.bfloat16, batch_tile=1024, out_dtype=None):
    b, n, d = q.shape
    B = block_size
    assert n == B * B, "sequence length must be block_size**2"
    R = (rel_height.shape[0] + 1) // 2
    assert rel_width.shape == (2 * R - 1, d)
    assert rel_height.shape == (2 * R - 1, d)
    # HaloNet always has rel_size = block + 2*halo >= block; if this were
    # violated the reference's rel_to_abs gather semantics change.
    assert R >= B, "rel_size must be >= block_size"
    if out_dtype is None:
        out_dtype = q.dtype
    n_out = R * R
    n_pad = _round_up(n_out, 128)          # lane-dense output (full vst stores)

    rhs = _build_fused_rhs(rel_height, rel_width, B, n_pad, compute_dtype)

    # Batch is the matmul M dimension; tile it in multiples of 16 sublanes.
    num_tiles = pl.cdiv(b, batch_tile)
    tb = _round_up(pl.cdiv(b, num_tiles), 16)
    b_pad = tb * num_tiles

    # (batch, B*B, d) -> (B*B, batch, d): rows for a fixed in-block position
    # form one rectangular tile picked by grid axis 0.
    q2 = jnp.transpose(q, (1, 0, 2)).astype(compute_dtype)
    if b_pad != b:
        q2 = jnp.pad(q2, ((0, 0), (0, b_pad - b), (0, 0)))

    out = pl.pallas_call(
        _rel_pos_kernel,
        out_shape=jax.ShapeDtypeStruct((B * B, b_pad, n_pad), out_dtype),
        grid=(B * B, num_tiles),           # xy outer, batch tiles inner
        in_specs=[
            # q rows for this (xy, batch-tile)
            pl.BlockSpec((None, tb, d), lambda xy, bt: (xy, bt, 0)),
            # fused table for this xy; block index constant across inner bt
            # steps, so it is not re-DMA'd per batch tile.
            pl.BlockSpec((None, d, n_pad), lambda xy, bt: (xy, 0, 0)),
        ],
        out_specs=pl.BlockSpec((None, tb, n_pad), lambda xy, bt: (xy, bt, 0)),
        compiler_params=pltpu.CompilerParams(
            dimension_semantics=("parallel", "parallel")),
    )(q2, rhs)

    out = out[:, :b, :n_out]                       # drop batch + lane padding
    return jnp.transpose(out, (1, 0, 2))           # (batch, B*B, R*R)


# ---------------- pure-JAX reference (literal port of the PyTorch code) -----


def _rel_to_abs_ref(x):
    b, l, m = x.shape
    r = (m + 1) // 2
    x = jnp.concatenate([x, jnp.zeros((b, l, 1), x.dtype)], axis=2)
    flat_x = x.reshape(b, l * (m + 1))
    flat_x = jnp.concatenate([flat_x, jnp.zeros((b, m - l), x.dtype)], axis=1)
    final_x = flat_x.reshape(b, l + 1, m)
    return final_x[:, :l, -r:]


def _relative_logits_1d_ref(q, rel_k):
    b, h, w, _ = q.shape
    r = (rel_k.shape[0] + 1) // 2
    logits = jnp.einsum('bxyd,rd->bxyr', q, rel_k)
    logits = logits.reshape(b * h, w, 2 * r - 1)
    logits = _rel_to_abs_ref(logits)
    logits = logits.reshape(b, h, w, r)
    logits = jnp.broadcast_to(logits[:, :, None, :, :], (b, h, r, w, r))
    return logits


def rel_pos_emb_ref(q, rel_height, rel_width, block_size):
    b, n, d = q.shape
    B = block_size
    q4 = q.reshape(b, B, B, d)
    rlw = _relative_logits_1d_ref(q4, rel_width)                        # b x i y j
    r = rlw.shape[2]
    rlw = jnp.transpose(rlw, (0, 1, 3, 2, 4)).reshape(b, B * B, r * r)  # b (x y)(i j)
    qT = jnp.transpose(q4, (0, 2, 1, 3))
    rlh = _relative_logits_1d_ref(qT, rel_height)                       # b x i y j
    rlh = jnp.transpose(rlh, (0, 3, 1, 4, 2)).reshape(b, B * B, r * r)  # b (y x)(j i)
    return rlw + rlh


if __name__ == "__main__":
    block_size, rel_size, dim_head, batch = 4, 6, 32, 2
    key = jax.random.PRNGKey(0)
    kq, kh, kw = jax.random.split(key, 3)
    scale = dim_head ** (-0.5)
    rel_height = jax.random.normal(kh, (rel_size * 2 - 1, dim_head), jnp.float32) * scale
    rel_width = jax.random.normal(kw, (rel_size * 2 - 1, dim_head), jnp.float32) * scale
    q = jax.random.normal(kq, (batch, block_size * block_size, dim_head), jnp.float32)

    ref = rel_pos_emb_ref(q, rel_height, rel_width, block_size)

    # 1) f32 MXU operands: semantics check (tolerance robust to MXU pass modes).
    out_f32 = jax.block_until_ready(
        rel_pos_emb(q, rel_height, rel_width, block_size,
                    compute_dtype=jnp.float32))
    assert out_f32.shape == (batch, block_size ** 2, rel_size ** 2), out_f32.shape
    assert jnp.allclose(out_f32, ref, atol=2e-2, rtol=2e-2), float(
        jnp.max(jnp.abs(out_f32 - ref)))

    # 2) default bf16 MXU path (f32 accumulation), bf16-appropriate tolerance.
    out_bf16 = jax.block_until_ready(
        rel_pos_emb(q, rel_height, rel_width, block_size))
    assert out_bf16.shape == (batch, block_size ** 2, rel_size ** 2), out_bf16.shape
    assert jnp.allclose(out_bf16, ref, atol=5e-2, rtol=5e-2), float(
        jnp.max(jnp.abs(out_bf16 - ref)))

    print("KERNEL_OK")
</pallas_src>

<mosaic_0001>
module attributes {stable_mosaic.version = 11 : i64} {
  func.func @_rel_pos_kernel(%arg0: i32, %arg1: i32, %arg2: memref<1x16x32xf32, #tpu.memory_space<vmem>>, %arg3: memref<1x32x128xf32, #tpu.memory_space<vmem>>, %arg4: memref<1x16x128xf32, #tpu.memory_space<vmem>>) attributes {dimension_semantics = [#tpu.dimension_semantics<parallel>, #tpu.dimension_semantics<parallel>], iteration_bounds = array<i64: 16, 1>, scalar_prefetch = 0 : i64, scratch_operands = 0 : i64, tpu.core_type = #tpu.core_type<tc>, window_params = [{transform_indices = @transform_0, window_bounds = array<i64: 1, 16, 32>}, {transform_indices = @transform_1, window_bounds = array<i64: 1, 32, 128>}, {transform_indices = @transform_2, window_bounds = array<i64: 1, 16, 128>}]} {
    %c0 = arith.constant 0 : index
    %c0_0 = arith.constant 0 : index
    %c0_1 = arith.constant 0 : index
    %0 = vector.load %arg2[%c0, %c0_0, %c0_1] : memref<1x16x32xf32, #tpu.memory_space<vmem>>, vector<1x16x32xf32>
    %1 = vector.shape_cast %0 : vector<1x16x32xf32> to vector<16x32xf32>
    %c0_2 = arith.constant 0 : index
    %c0_3 = arith.constant 0 : index
    %c0_4 = arith.constant 0 : index
    %2 = vector.load %arg3[%c0_2, %c0_3, %c0_4] : memref<1x32x128xf32, #tpu.memory_space<vmem>>, vector<1x32x128xf32>
    %3 = vector.shape_cast %2 : vector<1x32x128xf32> to vector<32x128xf32>
    %cst = arith.constant dense<0.000000e+00> : vector<16x128xf32>
    %4 = tpu.matmul %1, %3, %cst {dimension_numbers = #tpu.dot_dimension_numbers<[1], [0], [0], [1], [0, 0, 1, 1], [], []>} : vector<16x32xf32>, vector<32x128xf32>, vector<16x128xf32> -> vector<16x128xf32>
    %c0_5 = arith.constant 0 : index
    %c0_6 = arith.constant 0 : index
    %c0_7 = arith.constant 0 : index
    %5 = vector.load %arg4[%c0_5, %c0_6, %c0_7] : memref<1x16x128xf32, #tpu.memory_space<vmem>>, vector<1x16x128xf32>
    %6 = vector.shape_cast %5 : vector<1x16x128xf32> to vector<16x128xf32>
    %7 = vector.shape_cast %4 : vector<16x128xf32> to vector<1x16x128xf32>
    tpu.vector_store %arg4[%c0_5, %c0_6, %c0_7], %7 {strides = array<i32>} : memref<1x16x128xf32, #tpu.memory_space<vmem>>, vector<1x16x128xf32>,
    return
  }
  func.func @transform_0(%arg0: i32, %arg1: i32) -> (i32, i32, i32) {
    %c0_i32 = arith.constant 0 : i32
    %c0_i32_0 = arith.constant 0 : i32
    return %arg0, %arg1, %c0_i32 : i32, i32, i32
  }
  func.func @transform_1(%arg0: i32, %arg1: i32) -> (i32, i32, i32) {
    %c0_i32 = arith.constant 0 : i32
    %c0_i32_0 = arith.constant 0 : i32
    %c0_i32_1 = arith.constant 0 : i32
    return %arg0, %c0_i32, %c0_i32_0 : i32, i32, i32
  }
  func.func @transform_2(%arg0: i32, %arg1: i32) -> (i32, i32, i32) {
    %c0_i32 = arith.constant 0 : i32
    %c0_i32_0 = arith.constant 0 : i32
    return %arg0, %arg1, %c0_i32 : i32, i32, i32
  }
}

</mosaic_0001>

<llo_original>
// kernel: tpu_custom_call.1
$region0: #{tpu_custom_call.1}
  #allocation0 [shape = 'u32[]', space=smem, size = 0x4, offset = 0x4, fixed_abs, tag = 'smem constant byte address 0x4 - core index']
  #allocation1 [shape = 'u32[144,128]{1,0:T(1,128)}', space=vmem, size = 0x12000, scoped, tag = 'internal scratch']
  %s0 = inlined_call_operand.hbm [shape: f32[16,16,32], index: 0, kind: input, shape index: {}]
  %s1 = inlined_call_operand.hbm [shape: f32[16,32,128], index: 1, kind: input, shape index: {}]
  %s2 = inlined_call_operand.hbm [shape: f32[16,16,128], index: 2, kind: output, shape index: {}]
  %s3 = sld [smem:[#allocation0]]
  $region49: #{tpu_custom_call.1} parent=0
    _
  %s5 = ssub.s32 1, %s3
  %s6 = scalar_select 0, %s5, %s3
  $region1: #{tpu_custom_call.1} parent=0
    #allocation2 [shape = 'u8[16384]{0}', space=vmem, size = 0x4000, scoped, tag = 'input window, operand 0']
    #allocation3 [shape = 's32[2]{0}', space=sflag, size = 0x8, scoped, tag = 'scoped memory for tpu_custom_call.1']
    #allocation4 [shape = 's32[2]{0}', space=sflag, size = 0x8, scoped, tag = 'scoped memory for tpu_custom_call.1']
    #allocation5 [shape = 'u8[32768]{0}', space=vmem, size = 0x8000, scoped, tag = 'input window, operand 1']
    #allocation6 [shape = 's32[2]{0}', space=sflag, size = 0x8, scoped, tag = 'scoped memory for tpu_custom_call.1']
    #allocation7 [shape = 'u8[16384]{0}', space=vmem, size = 0x4000, scoped, tag = 'output window, operand 0']
    %7 = vsyncpa [#allocation3], 0
    %s8 = scalar_lea.sflag [#allocation3], 1
    %9 = vsyncpa %s8, 0
    %10 = vsyncpa [#allocation6], 0
    %s11 = scalar_lea.sflag [#allocation6], 1
    %12 = vsyncpa %s11, 0
    %13 = vsyncpa [#allocation4], 0
    %s14 = scalar_lea.sflag [#allocation4], 1
    %15 = vsyncpa %s14, 0
    loop: start=0, step=1, limit=18
    $region2: #{tpu_custom_call.1} parent=1 // loop_pre_header
      _
    $region3: #{tpu_custom_call.1} parent=1 // loop_header
      %s17 = sphi 0, %s21
      %p18 = scmp.ge.s32.totalorder %s17, 18
      %s24 = sphi 0, %s36
      %s25 = sphi 0, %s32
      %s26 = sphi 0, %s24
      %s27 = sphi 0, %s25
      %s28 = sphi 0, %s26
      %s29 = sphi 0, %s27
      %s41 = sphi 0, %s43
      %s44 = sphi 0, %s41
      %s45 = sphi 0, %s44
      %s61 = sphi 0, %s45
      %s67 = sphi 0, %s69
      %s70 = sphi 0, %s67
      %s71 = sphi 0, %s70
      %s87 = sphi 0, %s71
      %s95 = sphi 0, %s97
      %s98 = sphi 0, %s95
      %s99 = sphi 0, %s98
      %s115 = sphi 0, %s99
    $region4: #{tpu_custom_call.1} parent=1 // loop_header_branch
      %20 = sbr.rel (%p18) target = $region8
    $region5: #{tpu_custom_call.1} parent=1 // loop_body
      %s22 = ssub.s32 %s17, 1
      %s23 = ssub.s32 %s17, 2
      %s30 = sadd.s32 1, %s25
      %p31 = scmp.ge.s32.totalorder %s30, 1
      %s32 = scalar_select %p31, 0, %s30
      %s33 = sadd.s32 1, %s24
      %s34 = scalar_select %p31, %s33, %s24
      %p35 = scmp.ge.s32.totalorder %s34, 16
      %s36 = scalar_select %p35, 0, %s34
      %s37 = ssub.s32 %s24, %s36
      %s38 = ssub.s32 %s25, %s32
      %s39 = sor.u32 %s37, %s38
      %p40 = scmp.eq.s32.totalorder %s39, 0
      %s42 = sadd.s32 %s41, 1
      %s43 = scalar_select %p40, %s41, %s42
      %p46 = pneg %p40
      %p47 = scmp.eq.s32.totalorder %s17, 15
      %p48 = por %p46, %p47
      %p49 = scmp.ne.s32.totalorder %s41, %s44
      %p50 = scmp.eq.s32.totalorder %s17, 0
      %p51 = por %p49, %p50
      %p52 = scmp.ne.s32.totalorder %s41, %s44
      %p53 = scmp.eq.s32.totalorder %s22, 15
      %p54 = por %p52, %p53
      %p55 = scmp.ne.s32.totalorder %s44, %s45
      %p56 = scmp.eq.s32.totalorder %s22, 0
      %p57 = por %p55, %p56
      %p58 = scmp.ne.s32.totalorder %s44, %s45
      %p59 = scmp.eq.s32.totalorder %s23, 15
      %p60 = por %p58, %p59
      %p62 = scmp.ne.s32.totalorder %s45, %s61
      %p63 = scmp.eq.s32.totalorder %s23, 0
      %p64 = por %p62, %p63
      %s65 = ssub.s32 %s24, %s36
      %p66 = scmp.eq.s32.totalorder %s65, 0
      %s68 = sadd.s32 %s67, 1
      %s69 = scalar_select %p66, %s67, %s68
      %p72 = pneg %p66
      %p73 = scmp.eq.s32.totalorder %s17, 15
      %p74 = por %p72, %p73
      %p75 = scmp.ne.s32.totalorder %s67, %s70
      %p76 = scmp.eq.s32.totalorder %s17, 0
      %p77 = por %p75, %p76
      %p78 = scmp.ne.s32.totalorder %s67, %s70
      %p79 = scmp.eq.s32.totalorder %s22, 15
      %p80 = por %p78, %p79
      %p81 = scmp.ne.s32.totalorder %s70, %s71
      %p82 = scmp.eq.s32.totalorder %s22, 0
      %p83 = por %p81, %p82
      %p84 = scmp.ne.s32.totalorder %s70, %s71
      %p85 = scmp.eq.s32.totalorder %s23, 15
      %p86 = por %p84, %p85
      %p88 = scmp.ne.s32.totalorder %s71, %s87
      %p89 = scmp.eq.s32.totalorder %s23, 0
      %p90 = por %p88, %p89
      %s91 = ssub.s32 %s24, %s36
      %s92 = ssub.s32 %s25, %s32
      %s93 = sor.u32 %s91, %s92
      %p94 = scmp.eq.s32.totalorder %s93, 0
      %s96 = sadd.s32 %s95, 1
      %s97 = scalar_select %p94, %s95, %s96
      %p100 = pneg %p94
      %p101 = scmp.eq.s32.totalorder %s17, 15
      %p102 = por %p100, %p101
      %p103 = scmp.ne.s32.totalorder %s95, %s98
      %p104 = scmp.eq.s32.totalorder %s17, 0
      %p105 = por %p103, %p104
      %p106 = scmp.ne.s32.totalorder %s95, %s98
      %p107 = scmp.eq.s32.totalorder %s22, 15
      %p108 = por %p106, %p107
      %p109 = scmp.ne.s32.totalorder %s98, %s99
      %p110 = scmp.eq.s32.totalorder %s22, 0
      %p111 = por %p109, %p110
      %p112 = scmp.ne.s32.totalorder %s98, %s99
      %p113 = scmp.eq.s32.totalorder %s23, 15
      %p114 = por %p112, %p113
      %p116 = scmp.ne.s32.totalorder %s99, %s115
      %p117 = scmp.eq.s32.totalorder %s23, 0
      %p118 = por %p116, %p117
      %p119 = scmp.le.s32.totalorder 1, %s17
      %p120 = scmp.lt.s32.totalorder %s17, 17
      %p121 = pnand %p119, %p120
      %p122 = pneg %p121
      // Predicated region
      $region9: #{tpu_custom_call.1} parent=5 // pred_check
        _
      $region10: #{tpu_custom_call.1} parent=5 // pred_check_branch
        %124 = sbr.rel (%p121) target = $region12
      $region11: #{tpu_custom_call.1} parent=5 // pred_region
        %s125 = ssub.s32 %s17, 1
      $region12: #{tpu_custom_call.1} parent=5 // pred_fallthru
        _
      %p126 = scmp.lt.s32.totalorder %s17, 16
      // Predicated region
      $region13: #{tpu_custom_call.1} parent=5 // pred_check
        %p127 = pneg %p126
      $region14: #{tpu_custom_call.1} parent=5 // pred_check_branch
        %129 = sbr.rel (%p127) target = $region16
      $region15: #{tpu_custom_call.1} parent=5 // pred_region
        // Predicated region
        $region17: #{tpu_custom_call.1} parent=15 // pred_check
          %p130 = pneg %p51
        $region18: #{tpu_custom_call.1} parent=15 // pred_check_branch
          %132 = sbr.rel (%p130) target = $region20
        $region19: #{tpu_custom_call.1} parent=15 // pred_region
          %s133 = sand.u32 %s41, 1
          %s134 = scalar_lea.sflag [#allocation3], %s133
          %s135 = sand.u32 %s41, 1
          %s136 = smul.addr %s135, 16
          %s137 = scalar_lea.vmem [#allocation2], %s136
          %s138 = smul.u32 2, %s25
          %s140 = ssub.s32 256, 256
          %141 = vsyncadd %s134, %s140
          %s142 = smul.addr %s24, 2
          %s143 = sadd.s32 %s138, %s142
          %s144 = smul.addr %s143, 128
          %s145 = scalar_lea.hbm %s0, %s144
          %s146 = sshll.u32 %s137, 4
          %s147 = int_to_ptr.vmem [resolvable:$true] %s146
          %152 = dma.hbm_to_vmem [thread:$0]  %s145, 256, %s147, %s134, 128, 128, 8
        $region20: #{tpu_custom_call.1} parent=15 // pred_fallthru
          _
        // Predicated region
        $region21: #{tpu_custom_call.1} parent=15 // pred_check
          %p153 = pneg %p77
        $region22: #{tpu_custom_call.1} parent=15 // pred_check_branch
          %155 = sbr.rel (%p153) target = $region24
        $region23: #{tpu_custom_call.1} parent=15 // pred_region
          %s156 = sand.u32 %s67, 1
          %s157 = scalar_lea.sflag [#allocation6], %s156
          %s158 = sand.u32 %s67, 1
          %s159 = smul.addr %s158, 32
          %s160 = scalar_lea.vmem [#allocation5], %s159
          %s162 = ssub.s32 512, 512
          %163 = vsyncadd %s157, %s162
          %s164 = smul.addr %s24, 4
          %s165 = smul.addr %s164, 128
          %s166 = scalar_lea.hbm %s1, %s165
          %s167 = sshll.u32 %s160, 4
          %s168 = int_to_ptr.vmem [resolvable:$true] %s167
          %173 = dma.hbm_to_vmem [thread:$0]  %s166, 512, %s168, %s157, 128, 128, 8
        $region24: #{tpu_custom_call.1} parent=15 // pred_fallthru
          _
      $region16: #{tpu_custom_call.1} parent=5 // pred_fallthru
        _
      %p174 = scmp.le.s32.totalorder 1, %s17
      %p175 = scmp.lt.s32.totalorder %s17, 17
      %p176 = pnand %p174, %p175
      %p177 = pneg %p176
      // Predicated region
      $region25: #{tpu_custom_call.1} parent=5 // pred_check
        _
      $region26: #{tpu_custom_call.1} parent=5 // pred_check_branch
        %179 = sbr.rel (%p176) target = $region28
      $region27: #{tpu_custom_call.1} parent=5 // pred_region
        %s180 = ssub.s32 %s17, 1
        %s181 = sand.u32 %s44, 1
        %s182 = scalar_lea.sflag [#allocation3], %s181
        %s183 = sand.u32 %s44, 1
        %s184 = smul.addr %s183, 16
        %s185 = scalar_lea.vmem [#allocation2], %s184
        // Predicated region
        $region29: #{tpu_custom_call.1} parent=27 // pred_check
          %p186 = pneg %p57
        $region30: #{tpu_custom_call.1} parent=27 // pred_check_branch
          %188 = sbr.rel (%p186) target = $region32
        $region31: #{tpu_custom_call.1} parent=27 // pred_region
          %189 = dma.done %s182, 256
        $region32: #{tpu_custom_call.1} parent=27 // pred_fallthru
          _
        %s190 = sand.u32 %s70, 1
        %s191 = scalar_lea.sflag [#allocation6], %s190
        %s192 = sand.u32 %s70, 1
        %s193 = smul.addr %s192, 32
        %s194 = scalar_lea.vmem [#allocation5], %s193
        // Predicated region
        $region33: #{tpu_custom_call.1} parent=27 // pred_check
          %p195 = pneg %p83
        $region34: #{tpu_custom_call.1} parent=27 // pred_check_branch
          %197 = sbr.rel (%p195) target = $region36
        $region35: #{tpu_custom_call.1} parent=27 // pred_region
          %198 = dma.done %s191, 512
        $region36: #{tpu_custom_call.1} parent=27 // pred_fallthru
          _
        %s199 = sand.u32 %s44, 1
        %s200 = scalar_lea.sflag [#allocation3], %s199
        %s201 = sand.u32 %s44, 1
        %s202 = smul.addr %s201, 16
        %s203 = scalar_lea.vmem [#allocation2], %s202
        %p204 = pneg %p57
        %p205 = pneg %p54
        %s206 = sand.u32 %s70, 1
        %s207 = scalar_lea.sflag [#allocation6], %s206
        %s208 = sand.u32 %s70, 1
        %s209 = smul.addr %s208, 32
        %s210 = scalar_lea.vmem [#allocation5], %s209
        %p211 = pneg %p83
        %p212 = pneg %p80
        %p213 = pneg %p111
        %p214 = pneg %p108
        %s215 = sand.u32 %s98, 1
        %s216 = scalar_lea.sflag [#allocation4], %s215
        %s217 = sand.u32 %s98, 1
        %s218 = smul.addr %s217, 16
        %s219 = scalar_lea.vmem [#allocation7], %s218
        %s220 = smul.u32 2, %s27
        %s221 = smul.u32 2, %s27
        %v222 = vld [vmem:[%s185] sm:$0xff]
        %v223 = vld [vmem:[%s185 + $0x8] sm:$0xff]
        %v224 = vld [vmem:[%s194] sm:$0xff]
        %v225 = vld [vmem:[%s194 + $0x8] sm:$0xff]
        %v226 = vld [vmem:[%s194 + $0x10] sm:$0xff]
        %v227 = vld [vmem:[%s194 + $0x18] sm:$0xff]
        %vm228 = vcmask 261120
        %v230 = vsel %vm228, %v222, 0
        %v233 = vsel %vm228, %v223, 0
        %235 = vmatprep.subr.mxu0 0.0
        %236 = vmatpush1.msra.mxu0 %v224
        %237 = vmatprep.subr.mxu0 0.0
        %238 = vmatpush1.msra.mxu0 %v225
        %239 = vmatprep.subr.mxu0 0.0
        %240 = vmatpush1.msra.mxu0 %v226
        %241 = vmatprep.subr.mxu0 0.0
        %242 = vmatpush1.msra.mxu0 %v227
        %243 = vmatprep.subr.mxu0 0.0
        %244 = vmatpush1.msra.mxu0 0.0
        %245 = vmatprep.subr.mxu0 0.0
        %246 = vmatpush1.msra.mxu0 0.0
        %247 = vmatprep.subr.mxu0 0.0
        %248 = vmatpush1.msra.mxu0 0.0
        %249 = vmatprep.subr.mxu0 0.0
        %250 = vmatpush1.msra.mxu0 0.0
        %251 = vmatprep.subr.mxu0 0.0
        %252 = vmatpush1.msra.mxu0 0.0
        %253 = vmatprep.subr.mxu0 0.0
        %254 = vmatpush1.msra.mxu0 0.0
        %255 = vmatprep.subr.mxu0 0.0
        %256 = vmatpush1.msra.mxu0 0.0
        %257 = vmatprep.subr.mxu0 0.0
        %258 = vmatpush1.msra.mxu0 0.0
        %259 = vmatprep.subr.mxu0 0.0
        %260 = vmatpush1.msra.mxu0 0.0
        %261 = vmatprep.subr.mxu0 0.0
        %262 = vmatpush1.msra.mxu0 0.0
        %263 = vmatprep.subr.mxu0 0.0
        %264 = vmatpush1.msra.mxu0 0.0
        %265 = vmatprep.subr.mxu0 0.0
        %266 = vmatpush1.msra.mxu0 0.0
        %267 = vmatprep.subr.mxu0 0.0
        %268 = vmatpush1.msra.mxu0 0.0
        %269 = vmatprep.subr.mxu0 0.0
        %270 = vmatpush1.msra.mxu0 0.0
        %271 = vmatprep.subr.mxu0 0.0
        %272 = vmatpush1.msra.mxu0 0.0
        %273 = vmatprep.subr.mxu0 0.0
        %274 = vmatpush1.msra.mxu0 0.0
        %275 = vmatprep.subr.mxu0 0.0
        %276 = vmatpush1.msra.mxu0 0.0
        %277 = vmatprep.subr.mxu0 0.0
        %278 = vmatpush1.msra.mxu0 0.0
        %279 = vmatprep.subr.mxu0 0.0
        %280 = vmatpush1.msra.mxu0 0.0
        %281 = vmatprep.subr.mxu0 0.0
        %282 = vmatpush1.msra.mxu0 0.0
        %283 = vmatprep.subr.mxu0 0.0
        %284 = vmatpush1.msra.mxu0 0.0
        %285 = vmatprep.subr.mxu0 0.0
        %286 = vmatpush1.msra.mxu0 0.0
        %287 = vmatprep.subr.mxu0 0.0
        %288 = vmatpush1.msra.mxu0 0.0
        %289 = vmatprep.subr.mxu0 0.0
        %290 = vmatpush1.msra.mxu0 0.0
        %291 = vmatprep.subr.mxu0 0.0
        %292 = vmatpush1.msra.mxu0 0.0
        %293 = vmatprep.subr.mxu0 0.0
        %294 = vmatpush1.msra.mxu0 0.0
        %295 = vmatprep.subr.mxu0 0.0
        %296 = vmatpush1.msra.mxu0 0.0
        %297 = vmatprep.subr.mxu0 0.0
        %298 = vmatpush1.msra.mxu0 0.0
        %299 = vmatprep.mubr.f32.mxu0 0.0
        %300 = vmatmul.mubr.f32.gmra.mrb[0].mxu0 %v230
        %v301 = vpop.f32.mrb[0].mxu0
        %v302 = vadd.f32 0.0, %v301
        %v303 = vpop.f32.mrb[0].mxu0
        %304 = vmatprep.mubr.f32.mxu0 0.0
        %305 = vmatmul.mubr.f32.gmra.mrb[0].mxu0 %v233
        %v306 = vpop.f32.mrb[0].mxu0
        %v307 = vadd.f32 0.0, %v306
        %v308 = vpop.f32.mrb[0].mxu0
        %309 = vdwg.mxu0
        %310 = vst [vmem:[%s219] sm:$0xff] %v302
        %311 = vst [vmem:[%s219 + $0x8] sm:$0xff] %v307
        %s312 = sand.u32 %s98, 1
        %s313 = scalar_lea.sflag [#allocation4], %s312
        %s314 = sand.u32 %s98, 1
        %s315 = smul.addr %s314, 16
        %s316 = scalar_lea.vmem [#allocation7], %s315
        // Predicated region
        $region37: #{tpu_custom_call.1} parent=27 // pred_check
          %p317 = pneg %p108
        $region38: #{tpu_custom_call.1} parent=27 // pred_check_branch
          %319 = sbr.rel (%p317) target = $region40
        $region39: #{tpu_custom_call.1} parent=27 // pred_region
          %s320 = smul.u32 2, %s27
          %s322 = ssub.s32 256, 256
          %323 = vsyncadd %s313, %s322
          %s324 = smul.addr %s26, 2
          %s325 = sadd.s32 %s320, %s324
          %s326 = smul.addr %s325, 128
          %s327 = scalar_lea.hbm %s2, %s326
          %s328 = sshll.u32 %s316, 4
          %s329 = int_to_ptr.vmem [resolvable:$true] %s328
          %334 = dma.vmem_to_hbm [thread:$0]  %s329, 256, %s327, %s313, 128, 128, 8
        $region40: #{tpu_custom_call.1} parent=27 // pred_fallthru
          _
      $region28: #{tpu_custom_call.1} parent=5 // pred_fallthru
        _
      %p335 = scmp.le.s32.totalorder 2, %s17
      // Predicated region
      $region41: #{tpu_custom_call.1} parent=5 // pred_check
        %p336 = pneg %p335
      $region42: #{tpu_custom_call.1} parent=5 // pred_check_branch
        %338 = sbr.rel (%p336) target = $region44
      $region43: #{tpu_custom_call.1} parent=5 // pred_region
        %s339 = ssub.s32 %s17, 2
        // Predicated region
        $region45: #{tpu_custom_call.1} parent=43 // pred_check
          %p340 = pneg %p114
        $region46: #{tpu_custom_call.1} parent=43 // pred_check_branch
          %342 = sbr.rel (%p340) target = $region48
        $region47: #{tpu_custom_call.1} parent=43 // pred_region
          %s343 = sand.u32 %s99, 1
          %s344 = scalar_lea.sflag [#allocation4], %s343
          %s345 = sand.u32 %s99, 1
          %s346 = smul.addr %s345, 16
          %s347 = scalar_lea.vmem [#allocation7], %s346
          %348 = dma.done %s344, 256
        $region48: #{tpu_custom_call.1} parent=43 // pred_fallthru
          _
      $region44: #{tpu_custom_call.1} parent=5 // pred_fallthru
        _
    $region6: #{tpu_custom_call.1} parent=1 // loop_footer
      %s21 = sadd.s32 1, %s17
    $region7: #{tpu_custom_call.1} parent=1 // loop_footer_branch
      %16 = sbr.rel target = $region3
    $region8: #{tpu_custom_call.1} parent=1 // loop_exit
      _
    %349 = vsyncpa [#allocation3], 1
    %s350 = scalar_lea.sflag [#allocation3], 1
    %351 = vsyncpa %s350, 1
    %352 = vsyncpa [#allocation6], 1
    %s353 = scalar_lea.sflag [#allocation6], 1
    %354 = vsyncpa %s353, 1
    %355 = vsyncpa [#allocation4], 1
    %s356 = scalar_lea.sflag [#allocation4], 1
    %357 = vsyncpa %s356, 1

</llo_original>
